<compile_context>
chip_gen: v7x
topology: tpu7x:2x2x1
jax: 0.10.0
libtpu: 0.0.40
codegen_flags: <defaults>
</compile_context>

<pallas_src>
import functools
import math

import jax
import jax.numpy as jnp
from jax import lax
from jax.experimental import pallas as pl
from jax.experimental.pallas import tpu as pltpu


# --------------------------------------------------------------------------
# Kernel 1: fused QKV projection, reading the activation in NCHW layout.
# --------------------------------------------------------------------------
def _qkv_proj_kernel(x_ref, w_ref, b_ref, qkv_ref):
    # x_ref:  (1, C, TS)  fp32 (channel-major NCHW slice)
    # w_ref:  (C, 3C)     bf16 (q-columns pre-scaled by 1/sqrt(C))
    # b_ref:  (1, 3C)     fp32
    # qkv_ref:(1, TS, 3C) bf16
    x_t = jnp.transpose(x_ref[0], (1, 0)).astype(jnp.bfloat16)      # (TS, C)
    y = jnp.dot(x_t, w_ref[...], preferred_element_type=jnp.float32)  # (TS, 3C)
    qkv_ref[0] = (y + b_ref[...]).astype(qkv_ref.dtype)


# --------------------------------------------------------------------------
# Kernel 2: flash attention over VMEM-resident K/V + out_proj + residual.
# --------------------------------------------------------------------------
def _flash_attn_kernel(q_ref, k_ref, v_ref, xres_ref, wout_ref, bout_ref,
                       o_ref, m_sc, l_sc, acc_sc, *, block_k: int, num_kv: int):
    # q_ref:    (1, TQ, C) bf16 (q pre-scaled via the W_qkv column fold)
    # k_ref:    (1, S,  C) bf16 (full sequence, resident per batch)
    # v_ref:    (1, S,  C) bf16
    # xres_ref: (1, C, TQ) fp32 residual (channel-major)
    # wout_ref: (C, C)     bf16 (= W_out^T, so y = attn @ wout)
    # bout_ref: (1, C)     fp32
    # o_ref:    (1, C, TQ) same dtype as x
    # m_sc/l_sc:(TQ, 128)  fp32 lane-replicated running max / denom
    # acc_sc:   (TQ, C)    fp32 output accumulator
    m_sc[...] = jnp.full(m_sc.shape, -1e30, dtype=m_sc.dtype)
    l_sc[...] = jnp.zeros(l_sc.shape, dtype=l_sc.dtype)
    acc_sc[...] = jnp.zeros(acc_sc.shape, dtype=acc_sc.dtype)

    q = q_ref[0]                                                    # (TQ, C) bf16

    def kv_step(ki, carry):
        start = pl.multiple_of(ki * block_k, block_k)
        k = k_ref[0, pl.ds(start, block_k), :]                      # (TK, C) bf16
        v = v_ref[0, pl.ds(start, block_k), :]                      # (TK, C) bf16
        # Contract last dims of both operands -> no explicit k.T.
        s = lax.dot_general(q, k, (((1,), (1,)), ((), ())),
                            preferred_element_type=jnp.float32)     # (TQ, TK)
        m_prev = m_sc[...]                                          # (TQ, 128)
        m_new = jnp.maximum(m_prev, jnp.max(s, axis=-1, keepdims=True))
        alpha = jnp.exp(m_prev - m_new)                             # (TQ, 128)
        p = jnp.exp(s - m_new[:, 0:1])                              # (TQ, TK)
        l_sc[...] = alpha * l_sc[...] + jnp.sum(p, axis=-1, keepdims=True)
        acc_sc[...] = alpha[:, 0:1] * acc_sc[...] + jnp.dot(
            p.astype(jnp.bfloat16), v, preferred_element_type=jnp.float32)
        m_sc[...] = m_new
        return carry

    lax.fori_loop(0, num_kv, kv_step, 0)

    # Epilogue: normalize, out_proj, bias, residual, write channel-major.
    attn = acc_sc[...] * pl.reciprocal(l_sc[:, 0:1], approx=False)  # (TQ, C)
    out = jnp.dot(attn.astype(jnp.bfloat16), wout_ref[...],
                  preferred_element_type=jnp.float32) + bout_ref[...]  # (TQ, C)
    out_t = jnp.transpose(out, (1, 0)) + xres_ref[0]                # (C, TQ)
    o_ref[0] = out_t.astype(o_ref.dtype)


# --------------------------------------------------------------------------
# Wrapper
# --------------------------------------------------------------------------
def attention_block(x, w_in, b_in, w_out, b_out, *,
                    block_s=512, block_q=512, block_k=512):
    """x: (N, C, H, W) float32. Linear weights in PyTorch (out_feat, in_feat) layout."""
    n, c, h, w = x.shape
    s = h * w
    if c % 128 != 0:
        # TODO(synk): pad the channel axis to a multiple of 128 for lane-dense
        # blocks when C is small; SD decoder uses C=512 so this holds there.
        raise ValueError("attention_block kernel requires C % 128 == 0")
    block_s = min(block_s, s)
    block_q = min(block_q, s)
    block_k = min(block_k, s)
    assert s % block_s == 0 and s % block_q == 0 and s % block_k == 0

    # NCHW -> (N, C, S) is a plain reshape (no transpose / HBM round-trip).
    x_cs = x.reshape(n, c, s)

    # Fold 1/sqrt(d_head) (n_heads=1 -> d_head=C) into the q slice of W_in/b_in,
    # pre-transpose so the kernels do plain x @ W, and cast weights to bf16.
    scale = 1.0 / math.sqrt(float(c))
    col_scale = jnp.concatenate(
        [jnp.full((c,), scale, jnp.float32), jnp.ones((2 * c,), jnp.float32)])
    w_qkv = (jnp.transpose(w_in) * col_scale).astype(jnp.bfloat16)     # (C, 3C)
    b_qkv = (b_in * col_scale).reshape(1, 3 * c).astype(jnp.float32)   # (1, 3C)
    w_out_t = jnp.transpose(w_out).astype(jnp.bfloat16)                # (C, C)
    b_out2 = b_out.reshape(1, c).astype(jnp.float32)                   # (1, C)

    # ---- Kernel 1: fused QKV projection (NCHW in, seq-major QKV out) ----
    qkv = pl.pallas_call(
        _qkv_proj_kernel,
        out_shape=jax.ShapeDtypeStruct((n, s, 3 * c), jnp.bfloat16),
        grid_spec=pltpu.PrefetchScalarGridSpec(
            num_scalar_prefetch=0,
            grid=(n, s // block_s),
            in_specs=[
                pl.BlockSpec((1, c, block_s), lambda b, i: (b, 0, i)),
                pl.BlockSpec((c, 3 * c), lambda b, i: (0, 0)),
                pl.BlockSpec((1, 3 * c), lambda b, i: (0, 0)),
            ],
            out_specs=pl.BlockSpec((1, block_s, 3 * c), lambda b, i: (b, i, 0)),
        ),
        compiler_params=pltpu.CompilerParams(
            dimension_semantics=("parallel", "parallel"),
            vmem_limit_bytes=32 * 1024 * 1024),
        cost_estimate=pl.CostEstimate(
            flops=2 * n * s * c * 3 * c,
            transcendentals=0,
            bytes_accessed=n * s * c * 4 + n * s * 3 * c * 2 + c * 3 * c * 2),
    )(x_cs, w_qkv, b_qkv)

    # ---- Kernel 2: flash attention (K/V VMEM-resident per batch) --------
    nq = s // block_q
    nk = s // block_k
    kernel2 = functools.partial(_flash_attn_kernel, block_k=block_k, num_kv=nk)
    out_cs = pl.pallas_call(
        kernel2,
        out_shape=jax.ShapeDtypeStruct((n, c, s), x.dtype),
        grid_spec=pltpu.PrefetchScalarGridSpec(
            num_scalar_prefetch=0,
            grid=(n, nq),
            in_specs=[
                pl.BlockSpec((1, block_q, c), lambda b, qi: (b, qi, 0)),   # q tile
                pl.BlockSpec((1, s, c), lambda b, qi: (b, 0, 1)),          # K (full seq)
                pl.BlockSpec((1, s, c), lambda b, qi: (b, 0, 2)),          # V (full seq)
                pl.BlockSpec((1, c, block_q), lambda b, qi: (b, 0, qi)),   # residual (NCHW)
                pl.BlockSpec((c, c), lambda b, qi: (0, 0)),                # W_out^T
                pl.BlockSpec((1, c), lambda b, qi: (0, 0)),                # b_out
            ],
            out_specs=pl.BlockSpec((1, c, block_q), lambda b, qi: (b, 0, qi)),
            scratch_shapes=[
                pltpu.VMEM((block_q, 128), jnp.float32),   # running max m (lane-replicated)
                pltpu.VMEM((block_q, 128), jnp.float32),   # running sum l (lane-replicated)
                pltpu.VMEM((block_q, c), jnp.float32),     # output accumulator
            ],
        ),
        compiler_params=pltpu.CompilerParams(
            dimension_semantics=("parallel", "parallel"),
            vmem_limit_bytes=48 * 1024 * 1024),
        cost_estimate=pl.CostEstimate(
            flops=4 * n * s * s * c + 2 * n * s * c * c,
            transcendentals=n * s * s,
            bytes_accessed=(n * s * c * 2          # q
                            + n * 2 * s * c * 2    # k + v (read once per batch)
                            + n * s * c * 4        # residual in
                            + n * s * c * 4        # output
                            + c * c * 2)),         # W_out
    )(qkv, qkv, qkv, x_cs, w_out_t, b_out2)

    # (N, C, S) -> NCHW is a plain reshape.
    return out_cs.reshape(n, c, h, w)


def _reference(x, w_in, b_in, w_out, b_out):
    """Pure-JAX fp32 reproduction of the PyTorch forward for verification."""
    n, c, h, w = x.shape
    s = h * w
    xs = jnp.transpose(x.reshape(n, c, s), (0, 2, 1))             # (N, S, C)
    qkv = jnp.einsum("nsc,oc->nso", xs, w_in) + b_in              # (N, S, 3C)
    q, k, v = jnp.split(qkv, 3, axis=-1)
    scores = jnp.einsum("nqc,nkc->nqk", q, k) / math.sqrt(float(c))
    p = jax.nn.softmax(scores, axis=-1)
    out = jnp.einsum("nqk,nkc->nqc", p, v)
    out = jnp.einsum("nsc,oc->nso", out, w_out) + b_out
    out = out + xs
    return jnp.transpose(out, (0, 2, 1)).reshape(n, c, h, w)


if __name__ == "__main__":
    key = jax.random.PRNGKey(0)
    # C=128: divisible by 32 (GroupNorm(32, C) in __init__) and lane-dense (128).
    n, c, h, w = 2, 128, 16, 16   # S = 256

    k_x, k_wi, k_bi, k_wo, k_bo = jax.random.split(key, 5)
    x = jax.random.normal(k_x, (n, c, h, w), dtype=jnp.float32)

    # SelfAttention(1, C): in_proj Linear(C, 3C), out_proj Linear(C, C)
    w_in = jax.random.normal(k_wi, (3 * c, c), dtype=jnp.float32) * (1.0 / math.sqrt(c))
    b_in = jax.random.normal(k_bi, (3 * c,), dtype=jnp.float32) * 0.02
    w_out = jax.random.normal(k_wo, (c, c), dtype=jnp.float32) * (1.0 / math.sqrt(c))
    b_out = jax.random.normal(k_bo, (c,), dtype=jnp.float32) * 0.02

    # GroupNorm(32, C) parameters — declared by the module but never used in forward.
    gn_weight = jnp.ones((c,), dtype=jnp.float32)   # unused (parity with __init__)
    gn_bias = jnp.zeros((c,), dtype=jnp.float32)    # unused (parity with __init__)

    out = attention_block(x, w_in, b_in, w_out, b_out)
    out = jax.block_until_ready(out)

    ref = _reference(x, w_in, b_in, w_out, b_out)
    assert out.shape == x.shape and out.dtype == x.dtype
    # bf16 MXU operands (fp32 accumulation) -> loosened tolerance.
    max_err = float(jnp.max(jnp.abs(out - ref)))
    assert max_err < 5e-2, f"mismatch vs reference: max abs err {max_err}"

    print("KERNEL_OK")
</pallas_src>

<mosaic_0001>
module attributes {stable_mosaic.version = 11 : i64} {
  func.func @_qkv_proj_kernel(%arg0: i32, %arg1: i32, %arg2: memref<1x128x256xf32, #tpu.memory_space<vmem>>, %arg3: memref<128x384xbf16, #tpu.memory_space<vmem>>, %arg4: memref<1x384xf32, #tpu.memory_space<vmem>>, %arg5: memref<1x256x384xbf16, #tpu.memory_space<vmem>>) attributes {dimension_semantics = [#tpu.dimension_semantics<parallel>, #tpu.dimension_semantics<parallel>], iteration_bounds = array<i64: 2, 1>, scalar_prefetch = 0 : i64, scratch_operands = 0 : i64, tpu.core_type = #tpu.core_type<tc>, window_params = [{transform_indices = @transform_0, window_bounds = array<i64: 1, 128, 256>}, {pipeline_mode = #tpu.pipeline_mode<synchronous>, transform_indices = @transform_1, window_bounds = array<i64: 128, 384>}, {pipeline_mode = #tpu.pipeline_mode<synchronous>, transform_indices = @transform_2, window_bounds = array<i64: 1, 384>}, {transform_indices = @transform_3, window_bounds = array<i64: 1, 256, 384>}]} {
    %c0 = arith.constant 0 : index
    %c0_0 = arith.constant 0 : index
    %c0_1 = arith.constant 0 : index
    %0 = vector.load %arg2[%c0, %c0_0, %c0_1] : memref<1x128x256xf32, #tpu.memory_space<vmem>>, vector<1x128x256xf32>
    %1 = vector.shape_cast %0 : vector<1x128x256xf32> to vector<128x256xf32>
    %2 = tpu.transpose %1, [1, 0] : vector<128x256xf32> -> vector<256x128xf32>
    %3 = arith.truncf %2 : vector<256x128xf32> to vector<256x128xbf16>
    %c0_2 = arith.constant 0 : index
    %c0_3 = arith.constant 0 : index
    %4 = vector.load %arg3[%c0_2, %c0_3] : memref<128x384xbf16, #tpu.memory_space<vmem>>, vector<128x384xbf16>
    %cst = arith.constant dense<0.000000e+00> : vector<256x384xf32>
    %5 = tpu.matmul %3, %4, %cst {dimension_numbers = #tpu.dot_dimension_numbers<[1], [0], [0], [1], [0, 0, 1, 1], [], []>} : vector<256x128xbf16>, vector<128x384xbf16>, vector<256x384xf32> -> vector<256x384xf32>
    %c0_4 = arith.constant 0 : index
    %c0_5 = arith.constant 0 : index
    %6 = vector.load %arg4[%c0_4, %c0_5] : memref<1x384xf32, #tpu.memory_space<vmem>>, vector<1x384xf32>
    %7 = vector.broadcast %6 : vector<1x384xf32> to vector<256x384xf32>
    %8 = arith.addf %5, %7 : vector<256x384xf32>
    %9 = arith.truncf %8 : vector<256x384xf32> to vector<256x384xbf16>
    %c0_6 = arith.constant 0 : index
    %c0_7 = arith.constant 0 : index
    %c0_8 = arith.constant 0 : index
    %10 = vector.load %arg5[%c0_6, %c0_7, %c0_8] : memref<1x256x384xbf16, #tpu.memory_space<vmem>>, vector<1x256x384xbf16>
    %11 = vector.shape_cast %10 : vector<1x256x384xbf16> to vector<256x384xbf16>
    %12 = vector.shape_cast %9 : vector<256x384xbf16> to vector<1x256x384xbf16>
    tpu.vector_store %arg5[%c0_6, %c0_7, %c0_8], %12 {strides = array<i32>} : memref<1x256x384xbf16, #tpu.memory_space<vmem>>, vector<1x256x384xbf16>,
    return
  }
  func.func @transform_0(%arg0: i32, %arg1: i32) -> (i32, i32, i32) {
    %c0_i32 = arith.constant 0 : i32
    %c0_i32_0 = arith.constant 0 : i32
    return %arg0, %c0_i32, %arg1 : i32, i32, i32
  }
  func.func @transform_1(%arg0: i32, %arg1: i32) -> (i32, i32) {
    %c0_i32 = arith.constant 0 : i32
    %c0_i32_0 = arith.constant 0 : i32
    %c0_i32_1 = arith.constant 0 : i32
    return %c0_i32, %c0_i32_0 : i32, i32
  }
  func.func @transform_2(%arg0: i32, %arg1: i32) -> (i32, i32) {
    %c0_i32 = arith.constant 0 : i32
    %c0_i32_0 = arith.constant 0 : i32
    %c0_i32_1 = arith.constant 0 : i32
    return %c0_i32, %c0_i32_0 : i32, i32
  }
  func.func @transform_3(%arg0: i32, %arg1: i32) -> (i32, i32, i32) {
    %c0_i32 = arith.constant 0 : i32
    %c0_i32_0 = arith.constant 0 : i32
    return %arg0, %arg1, %c0_i32 : i32, i32, i32
  }
}

</mosaic_0001>

<llo_original>
// kernel: tpu_custom_call.1
$region0: #{tpu_custom_call.1}
  #allocation0 [shape = 'u32[]', space=smem, size = 0x4, offset = 0x4, fixed_abs, tag = 'smem constant byte address 0x4 - core index']
  #allocation1 [shape = 'u32[144,128]{1,0:T(1,128)}', space=vmem, size = 0x12000, scoped, tag = 'internal scratch']
  %s0 = inlined_call_operand.hbm [shape: f32[2,128,256], index: 0, kind: input, shape index: {}]
  %s1 = inlined_call_operand.hbm [shape: bf16[128,384], index: 1, kind: input, shape index: {}]
  %s2 = inlined_call_operand.vmem [shape: f32[1,384], index: 2, kind: input, shape index: {}]
  %s3 = inlined_call_operand.hbm [shape: bf16[2,256,384], index: 3, kind: output, shape index: {}]
  %s4 = sld [smem:[#allocation0]]
  $region53: #{tpu_custom_call.1} parent=0
    _
  %s6 = ssub.s32 1, %s4
  %s7 = scalar_select 0, %s6, %s4
  $region1: #{tpu_custom_call.1} parent=0
    #allocation2 [shape = 'u8[262144]{0}', space=vmem, size = 0x40000, scoped, tag = 'input window, operand 0']
    #allocation3 [shape = 's32[2]{0}', space=sflag, size = 0x8, scoped, tag = 'scoped memory for tpu_custom_call.1']
    #allocation4 [shape = 's32[2]{0}', space=sflag, size = 0x8, scoped, tag = 'scoped memory for tpu_custom_call.1']
    #allocation5 [shape = 'u8[98304]{0}', space=vmem, size = 0x18000, scoped, tag = 'input window, operand 1, single buffered']
    #allocation6 [shape = 's32[1]{0}', space=sflag, size = 0x4, scoped, tag = 'scoped memory for tpu_custom_call.1']
    #allocation7 [shape = 'u8[393216]{0}', space=vmem, size = 0x60000, scoped, tag = 'output window, operand 0']
    %8 = vsyncpa [#allocation3], 0
    %s9 = scalar_lea.sflag [#allocation3], 1
    %10 = vsyncpa %s9, 0
    %11 = vsyncpa [#allocation6], 0
    %12 = vsyncpa [#allocation4], 0
    %s13 = scalar_lea.sflag [#allocation4], 1
    %14 = vsyncpa %s13, 0
    loop: start=0, step=1, limit=4
    $region2: #{tpu_custom_call.1} parent=1 // loop_pre_header
      _
    $region3: #{tpu_custom_call.1} parent=1 // loop_header
      %s16 = sphi 0, %s20
      %p17 = scmp.ge.s32.totalorder %s16, 4
      %s23 = sphi 0, %s35
      %s24 = sphi 0, %s31
      %s25 = sphi 0, %s23
      %s26 = sphi 0, %s24
      %s27 = sphi 0, %s25
      %s28 = sphi 0, %s26
      %s40 = sphi 0, %s42
      %s43 = sphi 0, %s40
      %s44 = sphi 0, %s43
      %s60 = sphi 0, %s44
      %s64 = sphi 0, %s64
      %s66 = sphi 0, %s64
      %s67 = sphi 0, %s66
      %s81 = sphi 0, %s67
      %s85 = sphi 0, %s85
      %s87 = sphi 0, %s85
      %s88 = sphi 0, %s87
      %s102 = sphi 0, %s88
      %s110 = sphi 0, %s112
      %s113 = sphi 0, %s110
      %s114 = sphi 0, %s113
      %s130 = sphi 0, %s114
    $region4: #{tpu_custom_call.1} parent=1 // loop_header_branch
      %19 = sbr.rel (%p17) target = $region8
    $region5: #{tpu_custom_call.1} parent=1 // loop_body
      %s21 = ssub.s32 %s16, 1
      %s22 = ssub.s32 %s16, 2
      %s29 = sadd.s32 1, %s24
      %p30 = scmp.ge.s32.totalorder %s29, 1
      %s31 = scalar_select %p30, 0, %s29
      %s32 = sadd.s32 1, %s23
      %s33 = scalar_select %p30, %s32, %s23
      %p34 = scmp.ge.s32.totalorder %s33, 2
      %s35 = scalar_select %p34, 0, %s33
      %s36 = ssub.s32 %s23, %s35
      %s37 = ssub.s32 %s24, %s31
      %s38 = sor.u32 %s36, %s37
      %p39 = scmp.eq.s32.totalorder %s38, 0
      %s41 = sadd.s32 %s40, 1
      %s42 = scalar_select %p39, %s40, %s41
      %p45 = pneg %p39
      %p46 = scmp.eq.s32.totalorder %s16, 1
      %p47 = por %p45, %p46
      %p48 = scmp.ne.s32.totalorder %s40, %s43
      %p49 = scmp.eq.s32.totalorder %s16, 0
      %p50 = por %p48, %p49
      %p51 = scmp.ne.s32.totalorder %s40, %s43
      %p52 = scmp.eq.s32.totalorder %s21, 1
      %p53 = por %p51, %p52
      %p54 = scmp.ne.s32.totalorder %s43, %s44
      %p55 = scmp.eq.s32.totalorder %s21, 0
      %p56 = por %p54, %p55
      %p57 = scmp.ne.s32.totalorder %s43, %s44
      %p58 = scmp.eq.s32.totalorder %s22, 1
      %p59 = por %p57, %p58
      %p61 = scmp.ne.s32.totalorder %s44, %s60
      %p62 = scmp.eq.s32.totalorder %s22, 0
      %p63 = por %p61, %p62
      %s65 = sadd.s32 %s64, 1
      %p68 = scmp.eq.s32.totalorder %s16, 1
      %p69 = scmp.ne.s32.totalorder %s64, %s66
      %p70 = scmp.eq.s32.totalorder %s16, 0
      %p71 = por %p69, %p70
      %p72 = scmp.ne.s32.totalorder %s64, %s66
      %p73 = scmp.eq.s32.totalorder %s21, 1
      %p74 = por %p72, %p73
      %p75 = scmp.ne.s32.totalorder %s66, %s67
      %p76 = scmp.eq.s32.totalorder %s21, 0
      %p77 = por %p75, %p76
      %p78 = scmp.ne.s32.totalorder %s66, %s67
      %p79 = scmp.eq.s32.totalorder %s22, 1
      %p80 = por %p78, %p79
      %p82 = scmp.ne.s32.totalorder %s67, %s81
      %p83 = scmp.eq.s32.totalorder %s22, 0
      %p84 = por %p82, %p83
      %s86 = sadd.s32 %s85, 1
      %p89 = scmp.eq.s32.totalorder %s16, 1
      %p90 = scmp.ne.s32.totalorder %s85, %s87
      %p91 = scmp.eq.s32.totalorder %s16, 0
      %p92 = por %p90, %p91
      %p93 = scmp.ne.s32.totalorder %s85, %s87
      %p94 = scmp.eq.s32.totalorder %s21, 1
      %p95 = por %p93, %p94
      %p96 = scmp.ne.s32.totalorder %s87, %s88
      %p97 = scmp.eq.s32.totalorder %s21, 0
      %p98 = por %p96, %p97
      %p99 = scmp.ne.s32.totalorder %s87, %s88
      %p100 = scmp.eq.s32.totalorder %s22, 1
      %p101 = por %p99, %p100
      %p103 = scmp.ne.s32.totalorder %s88, %s102
      %p104 = scmp.eq.s32.totalorder %s22, 0
      %p105 = por %p103, %p104
      %s106 = ssub.s32 %s23, %s35
      %s107 = ssub.s32 %s24, %s31
      %s108 = sor.u32 %s106, %s107
      %p109 = scmp.eq.s32.totalorder %s108, 0
      %s111 = sadd.s32 %s110, 1
      %s112 = scalar_select %p109, %s110, %s111
      %p115 = pneg %p109
      %p116 = scmp.eq.s32.totalorder %s16, 1
      %p117 = por %p115, %p116
      %p118 = scmp.ne.s32.totalorder %s110, %s113
      %p119 = scmp.eq.s32.totalorder %s16, 0
      %p120 = por %p118, %p119
      %p121 = scmp.ne.s32.totalorder %s110, %s113
      %p122 = scmp.eq.s32.totalorder %s21, 1
      %p123 = por %p121, %p122
      %p124 = scmp.ne.s32.totalorder %s113, %s114
      %p125 = scmp.eq.s32.totalorder %s21, 0
      %p126 = por %p124, %p125
      %p127 = scmp.ne.s32.totalorder %s113, %s114
      %p128 = scmp.eq.s32.totalorder %s22, 1
      %p129 = por %p127, %p128
      %p131 = scmp.ne.s32.totalorder %s114, %s130
      %p132 = scmp.eq.s32.totalorder %s22, 0
      %p133 = por %p131, %p132
      %p134 = scmp.le.s32.totalorder 1, %s16
      %p135 = scmp.lt.s32.totalorder %s16, 3
      %p136 = pnand %p134, %p135
      %p137 = pneg %p136
      // Predicated region
      $region9: #{tpu_custom_call.1} parent=5 // pred_check
        _
      $region10: #{tpu_custom_call.1} parent=5 // pred_check_branch
        %139 = sbr.rel (%p136) target = $region12
      $region11: #{tpu_custom_call.1} parent=5 // pred_region
        %s140 = ssub.s32 %s16, 1
        // Predicated region
        $region13: #{tpu_custom_call.1} parent=11 // pred_check
          %p141 = pneg %p77
        $region14: #{tpu_custom_call.1} parent=11 // pred_check_branch
          %143 = sbr.rel (%p141) target = $region16
        $region15: #{tpu_custom_call.1} parent=11 // pred_region
          %s145 = ssub.s32 3072, 3072
          %146 = vsyncadd [#allocation6], %s145
          %s147 = sshll.u32 [#allocation5], 4
          %s148 = int_to_ptr.vmem [resolvable:$true] %s147
          %153 = dma.hbm_to_vmem [thread:$0]  %s1, 3072, %s148, [#allocation6], 192, 192, 12
        $region16: #{tpu_custom_call.1} parent=11 // pred_fallthru
          _
        // Predicated region
        $region17: #{tpu_custom_call.1} parent=11 // pred_check
          %p154 = pneg %p98
        $region18: #{tpu_custom_call.1} parent=11 // pred_check_branch
          %156 = sbr.rel (%p154) target = $region20
        $region19: #{tpu_custom_call.1} parent=11 // pred_region
          _
        $region20: #{tpu_custom_call.1} parent=11 // pred_fallthru
          _
      $region12: #{tpu_custom_call.1} parent=5 // pred_fallthru
        _
      %p157 = scmp.lt.s32.totalorder %s16, 2
      // Predicated region
      $region21: #{tpu_custom_call.1} parent=5 // pred_check
        %p158 = pneg %p157
      $region22: #{tpu_custom_call.1} parent=5 // pred_check_branch
        %160 = sbr.rel (%p158) target = $region24
      $region23: #{tpu_custom_call.1} parent=5 // pred_region
        // Predicated region
        $region25: #{tpu_custom_call.1} parent=23 // pred_check
          %p161 = pneg %p50
        $region26: #{tpu_custom_call.1} parent=23 // pred_check_branch
          %163 = sbr.rel (%p161) target = $region28
        $region27: #{tpu_custom_call.1} parent=23 // pred_region
          %s164 = sand.u32 %s40, 1
          %s165 = scalar_lea.sflag [#allocation3], %s164
          %s166 = sand.u32 %s40, 1
          %s167 = smul.addr %s166, 256
          %s168 = scalar_lea.vmem [#allocation2], %s167
          %s169 = smul.u32 2, %s24
          %s171 = ssub.s32 4096, 4096
          %172 = vsyncadd %s165, %s171
          %s173 = smul.addr %s23, 32
          %s174 = sadd.s32 %s169, %s173
          %s175 = smul.addr %s174, 128
          %s176 = scalar_lea.hbm %s0, %s175
          %s177 = sshll.u32 %s168, 4
          %s178 = int_to_ptr.vmem [resolvable:$true] %s177
          %183 = dma.hbm_to_vmem [thread:$0]  %s176, 4096, %s178, %s165, 256, 256, 16
        $region28: #{tpu_custom_call.1} parent=23 // pred_fallthru
          _
      $region24: #{tpu_custom_call.1} parent=5 // pred_fallthru
        _
      %p184 = scmp.le.s32.totalorder 1, %s16
      %p185 = scmp.lt.s32.totalorder %s16, 3
      %p186 = pnand %p184, %p185
      %p187 = pneg %p186
      // Predicated region
      $region29: #{tpu_custom_call.1} parent=5 // pred_check
        _
      $region30: #{tpu_custom_call.1} parent=5 // pred_check_branch
        %189 = sbr.rel (%p186) target = $region32
      $region31: #{tpu_custom_call.1} parent=5 // pred_region
        %s190 = ssub.s32 %s16, 1
        %s191 = sand.u32 %s43, 1
        %s192 = scalar_lea.sflag [#allocation3], %s191
        %s193 = sand.u32 %s43, 1
        %s194 = smul.addr %s193, 256
        %s195 = scalar_lea.vmem [#allocation2], %s194
        // Predicated region
        $region33: #{tpu_custom_call.1} parent=31 // pred_check
          %p196 = pneg %p56
        $region34: #{tpu_custom_call.1} parent=31 // pred_check_branch
          %198 = sbr.rel (%p196) target = $region36
        $region35: #{tpu_custom_call.1} parent=31 // pred_region
          %199 = dma.done %s192, 4096
        $region36: #{tpu_custom_call.1} parent=31 // pred_fallthru
          _
        // Predicated region
        $region37: #{tpu_custom_call.1} parent=31 // pred_check
          %p200 = pneg %p77
        $region38: #{tpu_custom_call.1} parent=31 // pred_check_branch
          %202 = sbr.rel (%p200) target = $region40
        $region39: #{tpu_custom_call.1} parent=31 // pred_region
          %203 = dma.done [#allocation6], 3072
        $region40: #{tpu_custom_call.1} parent=31 // pred_fallthru
          _
        %s204 = sand.u32 %s43, 1
        %s205 = scalar_lea.sflag [#allocation3], %s204
        %s206 = sand.u32 %s43, 1
        %s207 = smul.addr %s206, 256
        %s208 = scalar_lea.vmem [#allocation2], %s207
        %p209 = pneg %p56
        %p210 = pneg %p53
        %p211 = pneg %p77
        %p212 = pneg %p74
        %p213 = pneg %p98
        %p214 = pneg %p95
        %p215 = pneg %p126
        %p216 = pneg %p123
        %s217 = sand.u32 %s113, 1
        %s218 = scalar_lea.sflag [#allocation4], %s217
        %s219 = sand.u32 %s113, 1
        %s220 = smul.addr %s219, 384
        %s221 = scalar_lea.vmem [#allocation7], %s220
        %s222 = smul.u32 2, %s26
        %s223 = smul.u32 32, %s26
        %v225 = vld [vmem:[%s195] sm:$0xff]
        %v226 = vld [vmem:[%s195 + $0x8] sm:$0xff]
        %v227 = vld [vmem:[%s195 + $0x10] sm:$0xff]
        %v228 = vld [vmem:[%s195 + $0x18] sm:$0xff]
        %v229 = vld [vmem:[%s195 + $0x20] sm:$0xff]
        %v230 = vld [vmem:[%s195 + $0x28] sm:$0xff]
        %v231 = vld [vmem:[%s195 + $0x30] sm:$0xff]
        %v232 = vld [vmem:[%s195 + $0x38] sm:$0xff]
        %v233 = vld [vmem:[%s195 + $0x40] sm:$0xff]
        %v234 = vld [vmem:[%s195 + $0x48] sm:$0xff]
        %v235 = vld [vmem:[%s195 + $0x50] sm:$0xff]
        %v236 = vld [vmem:[%s195 + $0x58] sm:$0xff]
        %v237 = vld [vmem:[%s195 + $0x60] sm:$0xff]
        %v238 = vld [vmem:[%s195 + $0x68] sm:$0xff]
        %v239 = vld [vmem:[%s195 + $0x70] sm:$0xff]
        %v240 = vld [vmem:[%s195 + $0x78] sm:$0xff]
        %v241 = vld [vmem:[%s195 + $0x80] sm:$0xff]
        %v242 = vld [vmem:[%s195 + $0x88] sm:$0xff]
        %v243 = vld [vmem:[%s195 + $0x90] sm:$0xff]
        %v244 = vld [vmem:[%s195 + $0x98] sm:$0xff]
        %v245 = vld [vmem:[%s195 + $0xa0] sm:$0xff]
        %v246 = vld [vmem:[%s195 + $0xa8] sm:$0xff]
        %v247 = vld [vmem:[%s195 + $0xb0] sm:$0xff]
        %v248 = vld [vmem:[%s195 + $0xb8] sm:$0xff]
        %v249 = vld [vmem:[%s195 + $0xc0] sm:$0xff]
        %v250 = vld [vmem:[%s195 + $0xc8] sm:$0xff]
        %v251 = vld [vmem:[%s195 + $0xd0] sm:$0xff]
        %v252 = vld [vmem:[%s195 + $0xd8] sm:$0xff]
        %v253 = vld [vmem:[%s195 + $0xe0] sm:$0xff]
        %v254 = vld [vmem:[%s195 + $0xe8] sm:$0xff]
        %v255 = vld [vmem:[%s195 + $0xf0] sm:$0xff]
        %v256 = vld [vmem:[%s195 + $0xf8] sm:$0xff]
        %257 = vxpose.xlu0.b32.start [1/16] %v225, 128
        %258 = vxpose.xlu0.b32.cont [2/16] %v227, 128
        %259 = vxpose.xlu0.b32.cont [3/16] %v229, 128
        %260 = vxpose.xlu0.b32.cont [4/16] %v231, 128
        %261 = vxpose.xlu0.b32.cont [5/16] %v233, 128
        %262 = vxpose.xlu0.b32.cont [6/16] %v235, 128
        %263 = vxpose.xlu0.b32.cont [7/16] %v237, 128
        %264 = vxpose.xlu0.b32.cont [8/16] %v239, 128
        %265 = vxpose.xlu0.b32.cont [9/16] %v241, 128
        %266 = vxpose.xlu0.b32.cont [10/16] %v243, 128
        %267 = vxpose.xlu0.b32.cont [11/16] %v245, 128
        %268 = vxpose.xlu0.b32.cont [12/16] %v247, 128
        %269 = vxpose.xlu0.b32.cont [13/16] %v249, 128
        %270 = vxpose.xlu0.b32.cont [14/16] %v251, 128
        %271 = vxpose.xlu0.b32.cont [15/16] %v253, 128
        %272 = vxpose.xlu0.b32.end [16/16] %v255, 128
        %v273 = vpop.trf.xlu0
        %v274 = vpop.trf.xlu0
        %v275 = vpop.trf.xlu0
        %v276 = vpop.trf.xlu0
        %v277 = vpop.trf.xlu0
        %v278 = vpop.trf.xlu0
        %v279 = vpop.trf.xlu0
        %v280 = vpop.trf.xlu0
        %v281 = vpop.trf.xlu0
        %v282 = vpop.trf.xlu0
        %v283 = vpop.trf.xlu0
        %v284 = vpop.trf.xlu0
        %v285 = vpop.trf.xlu0
        %v286 = vpop.trf.xlu0
        %v287 = vpop.trf.xlu0
        %v288 = vpop.trf.xlu0
        %289 = vxpose.xlu0.b32.start [1/16] %v226, 128
        %290 = vxpose.xlu0.b32.cont [2/16] %v228, 128
        %291 = vxpose.xlu0.b32.cont [3/16] %v230, 128
        %292 = vxpose.xlu0.b32.cont [4/16] %v232, 128
        %293 = vxpose.xlu0.b32.cont [5/16] %v234, 128
        %294 = vxpose.xlu0.b32.cont [6/16] %v236, 128
        %295 = vxpose.xlu0.b32.cont [7/16] %v238, 128
        %296 = vxpose.xlu0.b32.cont [8/16] %v240, 128
        %297 = vxpose.xlu0.b32.cont [9/16] %v242, 128
        %298 = vxpose.xlu0.b32.cont [10/16] %v244, 128
        %299 = vxpose.xlu0.b32.cont [11/16] %v246, 128
        %300 = vxpose.xlu0.b32.cont [12/16] %v248, 128
        %301 = vxpose.xlu0.b32.cont [13/16] %v250, 128
        %302 = vxpose.xlu0.b32.cont [14/16] %v252, 128
        %303 = vxpose.xlu0.b32.cont [15/16] %v254, 128
        %304 = vxpose.xlu0.b32.end [16/16] %v256, 128
        %v305 = vpop.trf.xlu0
        %v306 = vpop.trf.xlu0
        %v307 = vpop.trf.xlu0
        %v308 = vpop.trf.xlu0
        %v309 = vpop.trf.xlu0
        %v310 = vpop.trf.xlu0
        %v311 = vpop.trf.xlu0
        %v312 = vpop.trf.xlu0
        %v313 = vpop.trf.xlu0
        %v314 = vpop.trf.xlu0
        %v315 = vpop.trf.xlu0
        %v316 = vpop.trf.xlu0
        %v317 = vpop.trf.xlu0
        %v318 = vpop.trf.xlu0
        %v319 = vpop.trf.xlu0
        %v320 = vpop.trf.xlu0
        %v321 = vpack.c.bf16 %v274, %v273
        %v322 = vpack.c.bf16 %v276, %v275
        %v323 = vpack.c.bf16 %v278, %v277
        %v324 = vpack.c.bf16 %v280, %v279
        %v325 = vpack.c.bf16 %v282, %v281
        %v326 = vpack.c.bf16 %v284, %v283
        %v327 = vpack.c.bf16 %v286, %v285
        %v328 = vpack.c.bf16 %v288, %v287
        %v329 = vpack.c.bf16 %v306, %v305
        %v330 = vpack.c.bf16 %v308, %v307
        %v331 = vpack.c.bf16 %v310, %v309
        %v332 = vpack.c.bf16 %v312, %v311
        %v333 = vpack.c.bf16 %v314, %v313
        %v334 = vpack.c.bf16 %v316, %v315
        %v335 = vpack.c.bf16 %v318, %v317
        %v336 = vpack.c.bf16 %v320, %v319
        %v337 = vld [vmem:[#allocation5] sm:$0xff]
        %v338 = vld [vmem:[#allocation5 + $0x8] sm:$0xf]
        %v339 = vld [vmem:[#allocation5 + $0xc] sm:$0xff]
        %v340 = vld [vmem:[#allocation5 + $0x14] sm:$0xf]
        %v341 = vld [vmem:[#allocation5 + $0x18] sm:$0xff]
        %v342 = vld [vmem:[#allocation5 + $0x20] sm:$0xf]
        %v343 = vld [vmem:[#allocation5 + $0x24] sm:$0xff]
        %v344 = vld [vmem:[#allocation5 + $0x2c] sm:$0xf]
        %v345 = vld [vmem:[#allocation5 + $0x30] sm:$0xff]
        %v346 = vld [vmem:[#allocation5 + $0x38] sm:$0xf]
        %v347 = vld [vmem:[#allocation5 + $0x3c] sm:$0xff]
        %v348 = vld [vmem:[#allocation5 + $0x44] sm:$0xf]
        %v349 = vld [vmem:[#allocation5 + $0x48] sm:$0xff]
        %v350 = vld [vmem:[#allocation5 + $0x50] sm:$0xf]
        %v351 = vld [vmem:[#allocation5 + $0x54] sm:$0xff]
        %v352 = vld [vmem:[#allocation5 + $0x5c] sm:$0xf]
        %v353 = vld [vmem:[#allocation5 + $0x60] sm:$0xff]
        %v354 = vld [vmem:[#allocation5 + $0x68] sm:$0xf]
        %v355 = vld [vmem:[#allocation5 + $0x6c] sm:$0xff]
        %v356 = vld [vmem:[#allocation5 + $0x74] sm:$0xf]
        %v357 = vld [vmem:[#allocation5 + $0x78] sm:$0xff]
        %v358 = vld [vmem:[#allocation5 + $0x80] sm:$0xf]
        %v359 = vld [vmem:[#allocation5 + $0x84] sm:$0xff]
        %v360 = vld [vmem:[#allocation5 + $0x8c] sm:$0xf]
        %v361 = vld [vmem:[#allocation5 + $0x90] sm:$0xff]
        %v362 = vld [vmem:[#allocation5 + $0x98] sm:$0xf]
        %v363 = vld [vmem:[#allocation5 + $0x9c] sm:$0xff]
        %v364 = vld [vmem:[#allocation5 + $0xa4] sm:$0xf]
        %v365 = vld [vmem:[#allocation5 + $0xa8] sm:$0xff]
        %v366 = vld [vmem:[#allocation5 + $0xb0] sm:$0xf]
        %v367 = vld [vmem:[#allocation5 + $0xb4] sm:$0xff]
        %v368 = vld [vmem:[#allocation5 + $0xbc] sm:$0xf]
        %v369 = vld [vmem:[%s2] sm:$0x7]
        %v371 = vlaneseq
        %v372 = vshrl.u32 %v371, 7
        %v373 = vsub.s32 0, %v372
        %v374 = vrot.slane %v369, %v373
        %v375 = vlaneseq
        %v376 = vshrl.u32 %v375, 7
        %v377 = vsub.s32 1, %v376
        %v378 = vrot.slane %v369, %v377
        %v379 = vlaneseq
        %v380 = vshrl.u32 %v379, 7
        %v381 = vsub.s32 2, %v380
        %v382 = vrot.slane %v369, %v381
        %v418 = vunpack.c.l.b16 %v337
        %v419 = vunpack.c.h.b16 %v337
        %v420 = vunpack.c.l.b16 %v338
        %v421 = vunpack.c.l.b16 %v339
        %v422 = vunpack.c.h.b16 %v339
        %v423 = vunpack.c.l.b16 %v340
        %v424 = vunpack.c.l.b16 %v341
        %v425 = vunpack.c.h.b16 %v341
        %v426 = vunpack.c.l.b16 %v342
        %v427 = vunpack.c.l.b16 %v343
        %v428 = vunpack.c.h.b16 %v343
        %v429 = vunpack.c.l.b16 %v344
        %v430 = vunpack.c.l.b16 %v345
        %v431 = vunpack.c.h.b16 %v345
        %v432 = vunpack.c.l.b16 %v346
        %v433 = vunpack.c.l.b16 %v347
        %v434 = vunpack.c.h.b16 %v347
        %v435 = vunpack.c.l.b16 %v348
        %v436 = vunpack.c.l.b16 %v349
        %v437 = vunpack.c.h.b16 %v349
        %v438 = vunpack.c.l.b16 %v350
        %v439 = vunpack.c.l.b16 %v351
        %v440 = vunpack.c.h.b16 %v351
        %v441 = vunpack.c.l.b16 %v352
        %v442 = vunpack.c.l.b16 %v353
        %v443 = vunpack.c.h.b16 %v353
        %v444 = vunpack.c.l.b16 %v354
        %v445 = vunpack.c.l.b16 %v355
        %v446 = vunpack.c.h.b16 %v355
        %v447 = vunpack.c.l.b16 %v356
        %v448 = vunpack.c.l.b16 %v357
        %v449 = vunpack.c.h.b16 %v357
        %v450 = vunpack.c.l.b16 %v358
        %v451 = vunpack.c.l.b16 %v359
        %v452 = vunpack.c.h.b16 %v359
        %v453 = vunpack.c.l.b16 %v360
        %v454 = vunpack.c.l.b16 %v361
        %v455 = vunpack.c.h.b16 %v361
        %v456 = vunpack.c.l.b16 %v362
        %v457 = vunpack.c.l.b16 %v363
        %v458 = vunpack.c.h.b16 %v363
        %v459 = vunpack.c.l.b16 %v364
        %v460 = vunpack.c.l.b16 %v365
        %v461 = vunpack.c.h.b16 %v365
        %v462 = vunpack.c.l.b16 %v366
        %v463 = vunpack.c.l.b16 %v367
        %v464 = vunpack.c.h.b16 %v367
        %v465 = vunpack.c.l.b16 %v368
        %v466 = vpack.c.b16 %v421, %v418
        %v467 = vpack.c.b16 %v422, %v419
        %v468 = vpack.c.b16 %v423, %v420
        %v469 = vpack.c.b16 %v427, %v424
        %v470 = vpack.c.b16 %v428, %v425
        %v471 = vpack.c.b16 %v429, %v426
        %v472 = vpack.c.b16 %v433, %v430
        %v473 = vpack.c.b16 %v434, %v431
        %v474 = vpack.c.b16 %v435, %v432
        %v475 = vpack.c.b16 %v439, %v436
        %v476 = vpack.c.b16 %v440, %v437
        %v477 = vpack.c.b16 %v441, %v438
        %v478 = vpack.c.b16 %v445, %v442
        %v479 = vpack.c.b16 %v446, %v443
        %v480 = vpack.c.b16 %v447, %v444
        %v481 = vpack.c.b16 %v451, %v448
        %v482 = vpack.c.b16 %v452, %v449
        %v483 = vpack.c.b16 %v453, %v450
        %v484 = vpack.c.b16 %v457, %v454
        %v485 = vpack.c.b16 %v458, %v455
        %v486 = vpack.c.b16 %v459, %v456
        %v487 = vpack.c.b16 %v463, %v460
        %v488 = vpack.c.b16 %v464, %v461
        %v489 = vpack.c.b16 %v465, %v462
        %514 = vmatprep.subr.bf16.mxu0 %v467
        %515 = vmatpush1.bf16.msra.mxu0 %v466
        %516 = vmatprep.subr.bf16.mxu0 %v470
        %517 = vmatpush1.bf16.msra.mxu0 %v469
        %518 = vmatprep.subr.bf16.mxu0 %v473
        %519 = vmatpush1.bf16.msra.mxu0 %v472
        %520 = vmatprep.subr.bf16.mxu0 %v476
        %521 = vmatpush1.bf16.msra.mxu0 %v475
        %522 = vmatprep.subr.bf16.mxu0 %v479
        %523 = vmatpush1.bf16.msra.mxu0 %v478
        %524 = vmatprep.subr.bf16.mxu0 %v482
        %525 = vmatpush1.bf16.msra.mxu0 %v481
        %526 = vmatprep.subr.bf16.mxu0 %v485
        %527 = vmatpush1.bf16.msra.mxu0 %v484
        %528 = vmatprep.subr.bf16.mxu0 %v488
        %529 = vmatpush1.bf16.msra.mxu0 %v487
        %530 = vmatprep.subr.bf16.mxu0 0
        %531 = vmatpush1.bf16.msra.mxu0 0
        %532 = vmatprep.subr.bf16.mxu0 0
        %533 = vmatpush1.bf16.msra.mxu0 0
        %534 = vmatprep.subr.bf16.mxu0 0
        %535 = vmatpush1.bf16.msra.mxu0 0
        %536 = vmatprep.subr.bf16.mxu0 0
        %537 = vmatpush1.bf16.msra.mxu0 0
        %538 = vmatprep.subr.bf16.mxu0 0
        %539 = vmatpush1.bf16.msra.mxu0 0
        %540 = vmatprep.subr.bf16.mxu0 0
        %541 = vmatpush1.bf16.msra.mxu0 0
        %542 = vmatprep.subr.bf16.mxu0 0
        %543 = vmatpush1.bf16.msra.mxu0 0
        %544 = vmatprep.subr.bf16.mxu0 0
        %545 = vmatpush1.bf16.msra.mxu0 0
        %546 = vmatprep.mubr.bf16.mxu0 0
        %547 = vmatmul.mubr.bf16.gmra.mrb[0].mxu0 %v321
        %v548 = vpop.f32.mrb[0].mxu0
        %v549 = vadd.f32 %v374, %v548
        %v550 = vpop.f32.mrb[0].mxu0
        %v551 = vadd.f32 %v378, %v550
        %v552 = vpop.f32.mrb[0].mxu0
        %v553 = vadd.f32 %v374, %v552
        %v554 = vpop.f32.mrb[0].mxu0
        %v555 = vadd.f32 %v378, %v554
        %556 = vmatprep.mubr.bf16.mxu0 0
        %557 = vmatmul.mubr.bf16.gmra.mrb[0].mxu0 %v322
        %v558 = vpop.f32.mrb[0].mxu0
        %v559 = vadd.f32 %v374, %v558
        %v560 = vpop.f32.mrb[0].mxu0
        %v561 = vadd.f32 %v378, %v560
        %v562 = vpop.f32.mrb[0].mxu0
        %v563 = vadd.f32 %v374, %v562
        %v564 = vpop.f32.mrb[0].mxu0
        %v565 = vadd.f32 %v378, %v564
        %566 = vmatprep.mubr.bf16.mxu0 0
        %567 = vmatmul.mubr.bf16.gmra.mrb[0].mxu0 %v323
        %v568 = vpop.f32.mrb[0].mxu0
        %v569 = vadd.f32 %v374, %v568
        %v570 = vpop.f32.mrb[0].mxu0
        %v571 = vadd.f32 %v378, %v570
        %v572 = vpop.f32.mrb[0].mxu0
        %v573 = vadd.f32 %v374, %v572
        %v574 = vpop.f32.mrb[0].mxu0
        %v575 = vadd.f32 %v378, %v574
        %576 = vmatprep.mubr.bf16.mxu0 0
        %577 = vmatmul.mubr.bf16.gmra.mrb[0].mxu0 %v324
        %v578 = vpop.f32.mrb[0].mxu0
        %v579 = vadd.f32 %v374, %v578
        %v580 = vpop.f32.mrb[0].mxu0
        %v581 = vadd.f32 %v378, %v580
        %v582 = vpop.f32.mrb[0].mxu0
        %v583 = vadd.f32 %v374, %v582
        %v584 = vpop.f32.mrb[0].mxu0
        %v585 = vadd.f32 %v378, %v584
        %586 = vmatprep.mubr.bf16.mxu0 0
        %587 = vmatmul.mubr.bf16.gmra.mrb[0].mxu0 %v325
        %v588 = vpop.f32.mrb[0].mxu0
        %v589 = vadd.f32 %v374, %v588
        %v590 = vpop.f32.mrb[0].mxu0
        %v591 = vadd.f32 %v378, %v590
        %v592 = vpop.f32.mrb[0].mxu0
        %v593 = vadd.f32 %v374, %v592
        %v594 = vpop.f32.mrb[0].mxu0
        %v595 = vadd.f32 %v378, %v594
        %596 = vmatprep.mubr.bf16.mxu0 0
        %597 = vmatmul.mubr.bf16.gmra.mrb[0].mxu0 %v326
        %v598 = vpop.f32.mrb[0].mxu0
        %v599 = vadd.f32 %v374, %v598
        %v600 = vpop.f32.mrb[0].mxu0
        %v601 = vadd.f32 %v378, %v600
        %v602 = vpop.f32.mrb[0].mxu0
        %v603 = vadd.f32 %v374, %v602
        %v604 = vpop.f32.mrb[0].mxu0
        %v605 = vadd.f32 %v378, %v604
        %606 = vmatprep.mubr.bf16.mxu0 0
        %607 = vmatmul.mubr.bf16.gmra.mrb[0].mxu0 %v327
        %v608 = vpop.f32.mrb[0].mxu0
        %v609 = vadd.f32 %v374, %v608
        %v610 = vpop.f32.mrb[0].mxu0
        %v611 = vadd.f32 %v378, %v610
        %v612 = vpop.f32.mrb[0].mxu0
        %v613 = vadd.f32 %v374, %v612
        %v614 = vpop.f32.mrb[0].mxu0
        %v615 = vadd.f32 %v378, %v614
        %616 = vmatprep.mubr.bf16.mxu0 0
        %617 = vmatmul.mubr.bf16.gmra.mrb[0].mxu0 %v328
        %v618 = vpop.f32.mrb[0].mxu0
        %v619 = vadd.f32 %v374, %v618
        %v620 = vpop.f32.mrb[0].mxu0
        %v621 = vadd.f32 %v378, %v620
        %v622 = vpop.f32.mrb[0].mxu0
        %v623 = vadd.f32 %v374, %v622
        %v624 = vpop.f32.mrb[0].mxu0
        %v625 = vadd.f32 %v378, %v624
        %626 = vmatprep.mubr.bf16.mxu0 0
        %627 = vmatmul.mubr.bf16.gmra.mrb[0].mxu0 %v329
        %v628 = vpop.f32.mrb[0].mxu0
        %v629 = vadd.f32 %v374, %v628
        %v630 = vpop.f32.mrb[0].mxu0
        %v631 = vadd.f32 %v378, %v630
        %v632 = vpop.f32.mrb[0].mxu0
        %v633 = vadd.f32 %v374, %v632
        %v634 = vpop.f32.mrb[0].mxu0
        %v635 = vadd.f32 %v378, %v634
        %636 = vmatprep.mubr.bf16.mxu0 0
        %637 = vmatmul.mubr.bf16.gmra.mrb[0].mxu0 %v330
        %v638 = vpop.f32.mrb[0].mxu0
        %v639 = vadd.f32 %v374, %v638
        %v640 = vpop.f32.mrb[0].mxu0
        %v641 = vadd.f32 %v378, %v640
        %v642 = vpop.f32.mrb[0].mxu0
        %v643 = vadd.f32 %v374, %v642
        %v644 = vpop.f32.mrb[0].mxu0
        %v645 = vadd.f32 %v378, %v644
        %646 = vmatprep.mubr.bf16.mxu0 0
        %647 = vmatmul.mubr.bf16.gmra.mrb[0].mxu0 %v331
        %v648 = vpop.f32.mrb[0].mxu0
        %v649 = vadd.f32 %v374, %v648
        %v650 = vpop.f32.mrb[0].mxu0
        %v651 = vadd.f32 %v378, %v650
        %v652 = vpop.f32.mrb[0].mxu0
        %v653 = vadd.f32 %v374, %v652
        %v654 = vpop.f32.mrb[0].mxu0
        %v655 = vadd.f32 %v378, %v654
        %656 = vmatprep.mubr.bf16.mxu0 0
        %657 = vmatmul.mubr.bf16.gmra.mrb[0].mxu0 %v332
        %v658 = vpop.f32.mrb[0].mxu0
        %v659 = vadd.f32 %v374, %v658
        %v660 = vpop.f32.mrb[0].mxu0
        %v661 = vadd.f32 %v378, %v660
        %v662 = vpop.f32.mrb[0].mxu0
        %v663 = vadd.f32 %v374, %v662
        %v664 = vpop.f32.mrb[0].mxu0
        %v665 = vadd.f32 %v378, %v664
        %666 = vmatprep.mubr.bf16.mxu0 0
        %667 = vmatmul.mubr.bf16.gmra.mrb[0].mxu0 %v333
        %v668 = vpop.f32.mrb[0].mxu0
        %v669 = vadd.f32 %v374, %v668
        %v670 = vpop.f32.mrb[0].mxu0
        %v671 = vadd.f32 %v378, %v670
        %v672 = vpop.f32.mrb[0].mxu0
        %v673 = vadd.f32 %v374, %v672
        %v674 = vpop.f32.mrb[0].mxu0
        %v675 = vadd.f32 %v378, %v674
        %676 = vmatprep.mubr.bf16.mxu0 0
        %677 = vmatmul.mubr.bf16.gmra.mrb[0].mxu0 %v334
        %v678 = vpop.f32.mrb[0].mxu0
        %v679 = vadd.f32 %v374, %v678
        %v680 = vpop.f32.mrb[0].mxu0
        %v681 = vadd.f32 %v378, %v680
        %v682 = vpop.f32.mrb[0].mxu0
        %v683 = vadd.f32 %v374, %v682
        %v684 = vpop.f32.mrb[0].mxu0
        %v685 = vadd.f32 %v378, %v684
        %686 = vmatprep.mubr.bf16.mxu0 0
        %687 = vmatmul.mubr.bf16.gmra.mrb[0].mxu0 %v335
        %v688 = vpop.f32.mrb[0].mxu0
        %v689 = vadd.f32 %v374, %v688
        %v690 = vpop.f32.mrb[0].mxu0
        %v691 = vadd.f32 %v378, %v690
        %v692 = vpop.f32.mrb[0].mxu0
        %v693 = vadd.f32 %v374, %v692
        %v694 = vpop.f32.mrb[0].mxu0
        %v695 = vadd.f32 %v378, %v694
        %696 = vmatprep.mubr.bf16.mxu0 0
        %697 = vmatmul.mubr.bf16.gmra.mrb[0].mxu0 %v336
        %v698 = vpop.f32.mrb[0].mxu0
        %v699 = vadd.f32 %v374, %v698
        %v700 = vpop.f32.mrb[0].mxu0
        %v701 = vadd.f32 %v378, %v700
        %v702 = vpop.f32.mrb[0].mxu0
        %v703 = vadd.f32 %v374, %v702
        %v704 = vpop.f32.mrb[0].mxu0
        %v705 = vadd.f32 %v378, %v704
        %706 = vdwg.mxu0
        %707 = vmatprep.subr.bf16.mxu0 0
        %708 = vmatpush1.bf16.msra.mxu0 %v468
        %709 = vmatprep.subr.bf16.mxu0 0
        %710 = vmatpush1.bf16.msra.mxu0 %v471
        %711 = vmatprep.subr.bf16.mxu0 0
        %712 = vmatpush1.bf16.msra.mxu0 %v474
        %713 = vmatprep.subr.bf16.mxu0 0
        %714 = vmatpush1.bf16.msra.mxu0 %v477
        %715 = vmatprep.subr.bf16.mxu0 0
        %716 = vmatpush1.bf16.msra.mxu0 %v480
        %717 = vmatprep.subr.bf16.mxu0 0
        %718 = vmatpush1.bf16.msra.mxu0 %v483
        %719 = vmatprep.subr.bf16.mxu0 0
        %720 = vmatpush1.bf16.msra.mxu0 %v486
        %721 = vmatprep.subr.bf16.mxu0 0
        %722 = vmatpush1.bf16.msra.mxu0 %v489
        %723 = vmatprep.subr.bf16.mxu0 0
        %724 = vmatpush1.bf16.msra.mxu0 0
        %725 = vmatprep.subr.bf16.mxu0 0
        %726 = vmatpush1.bf16.msra.mxu0 0
        %727 = vmatprep.subr.bf16.mxu0 0
        %728 = vmatpush1.bf16.msra.mxu0 0
        %729 = vmatprep.subr.bf16.mxu0 0
        %730 = vmatpush1.bf16.msra.mxu0 0
        %731 = vmatprep.subr.bf16.mxu0 0
        %732 = vmatpush1.bf16.msra.mxu0 0
        %733 = vmatprep.subr.bf16.mxu0 0
        %734 = vmatpush1.bf16.msra.mxu0 0
        %735 = vmatprep.subr.bf16.mxu0 0
        %736 = vmatpush1.bf16.msra.mxu0 0
        %737 = vmatprep.subr.bf16.mxu0 0
        %738 = vmatpush1.bf16.msra.mxu0 0
        %739 = vmatprep.mubr.bf16.mxu0 0
        %740 = vmatmul.mubr.bf16.gmra.mrb[0].mxu0 %v321
        %v741 = vpop.f32.mrb[0].mxu0
        %v742 = vadd.f32 %v382, %v741
        %v743 = vpop.f32.mrb[0].mxu0
        %v744 = vpop.f32.mrb[0].mxu0
        %v745 = vadd.f32 %v382, %v744
        %v746 = vpop.f32.mrb[0].mxu0
        %747 = vmatprep.mubr.bf16.mxu0 0
        %748 = vmatmul.mubr.bf16.gmra.mrb[0].mxu0 %v322
        %v749 = vpop.f32.mrb[0].mxu0
        %v750 = vadd.f32 %v382, %v749
        %v751 = vpop.f32.mrb[0].mxu0
        %v752 = vpop.f32.mrb[0].mxu0
        %v753 = vadd.f32 %v382, %v752
        %v754 = vpop.f32.mrb[0].mxu0
        %755 = vmatprep.mubr.bf16.mxu0 0
        %756 = vmatmul.mubr.bf16.gmra.mrb[0].mxu0 %v323
        %v757 = vpop.f32.mrb[0].mxu0
        %v758 = vadd.f32 %v382, %v757
        %v759 = vpop.f32.mrb[0].mxu0
        %v760 = vpop.f32.mrb[0].mxu0
        %v761 = vadd.f32 %v382, %v760
        %v762 = vpop.f32.mrb[0].mxu0
        %763 = vmatprep.mubr.bf16.mxu0 0
        %764 = vmatmul.mubr.bf16.gmra.mrb[0].mxu0 %v324
        %v765 = vpop.f32.mrb[0].mxu0
        %v766 = vadd.f32 %v382, %v765
        %v767 = vpop.f32.mrb[0].mxu0
        %v768 = vpop.f32.mrb[0].mxu0
        %v769 = vadd.f32 %v382, %v768
        %v770 = vpop.f32.mrb[0].mxu0
        %771 = vmatprep.mubr.bf16.mxu0 0
        %772 = vmatmul.mubr.bf16.gmra.mrb[0].mxu0 %v325
        %v773 = vpop.f32.mrb[0].mxu0
        %v774 = vadd.f32 %v382, %v773
        %v775 = vpop.f32.mrb[0].mxu0
        %v776 = vpop.f32.mrb[0].mxu0
        %v777 = vadd.f32 %v382, %v776
        %v778 = vpop.f32.mrb[0].mxu0
        %779 = vmatprep.mubr.bf16.mxu0 0
        %780 = vmatmul.mubr.bf16.gmra.mrb[0].mxu0 %v326
        %v781 = vpop.f32.mrb[0].mxu0
        %v782 = vadd.f32 %v382, %v781
        %v783 = vpop.f32.mrb[0].mxu0
        %v784 = vpop.f32.mrb[0].mxu0
        %v785 = vadd.f32 %v382, %v784
        %v786 = vpop.f32.mrb[0].mxu0
        %787 = vmatprep.mubr.bf16.mxu0 0
        %788 = vmatmul.mubr.bf16.gmra.mrb[0].mxu0 %v327
        %v789 = vpop.f32.mrb[0].mxu0
        %v790 = vadd.f32 %v382, %v789
        %v791 = vpop.f32.mrb[0].mxu0
        %v792 = vpop.f32.mrb[0].mxu0
        %v793 = vadd.f32 %v382, %v792
        %v794 = vpop.f32.mrb[0].mxu0
        %795 = vmatprep.mubr.bf16.mxu0 0
        %796 = vmatmul.mubr.bf16.gmra.mrb[0].mxu0 %v328
        %v797 = vpop.f32.mrb[0].mxu0
        %v798 = vadd.f32 %v382, %v797
        %v799 = vpop.f32.mrb[0].mxu0
        %v800 = vpop.f32.mrb[0].mxu0
        %v801 = vadd.f32 %v382, %v800
        %v802 = vpop.f32.mrb[0].mxu0
        %803 = vmatprep.mubr.bf16.mxu0 0
        %804 = vmatmul.mubr.bf16.gmra.mrb[0].mxu0 %v329
        %v805 = vpop.f32.mrb[0].mxu0
        %v806 = vadd.f32 %v382, %v805
        %v807 = vpop.f32.mrb[0].mxu0
        %v808 = vpop.f32.mrb[0].mxu0
        %v809 = vadd.f32 %v382, %v808
        %v810 = vpop.f32.mrb[0].mxu0
        %811 = vmatprep.mubr.bf16.mxu0 0
        %812 = vmatmul.mubr.bf16.gmra.mrb[0].mxu0 %v330
        %v813 = vpop.f32.mrb[0].mxu0
        %v814 = vadd.f32 %v382, %v813
        %v815 = vpop.f32.mrb[0].mxu0
        %v816 = vpop.f32.mrb[0].mxu0
        %v817 = vadd.f32 %v382, %v816
        %v818 = vpop.f32.mrb[0].mxu0
        %819 = vmatprep.mubr.bf16.mxu0 0
        %820 = vmatmul.mubr.bf16.gmra.mrb[0].mxu0 %v331
        %v821 = vpop.f32.mrb[0].mxu0
        %v822 = vadd.f32 %v382, %v821
        %v823 = vpop.f32.mrb[0].mxu0
        %v824 = vpop.f32.mrb[0].mxu0
        %v825 = vadd.f32 %v382, %v824
        %v826 = vpop.f32.mrb[0].mxu0
        %827 = vmatprep.mubr.bf16.mxu0 0
        %828 = vmatmul.mubr.bf16.gmra.mrb[0].mxu0 %v332
        %v829 = vpop.f32.mrb[0].mxu0
        %v830 = vadd.f32 %v382, %v829
        %v831 = vpop.f32.mrb[0].mxu0
        %v832 = vpop.f32.mrb[0].mxu0
        %v833 = vadd.f32 %v382, %v832
        %v834 = vpop.f32.mrb[0].mxu0
        %835 = vmatprep.mubr.bf16.mxu0 0
        %836 = vmatmul.mubr.bf16.gmra.mrb[0].mxu0 %v333
        %v837 = vpop.f32.mrb[0].mxu0
        %v838 = vadd.f32 %v382, %v837
        %v839 = vpop.f32.mrb[0].mxu0
        %v840 = vpop.f32.mrb[0].mxu0
        %v841 = vadd.f32 %v382, %v840
        %v842 = vpop.f32.mrb[0].mxu0
        %843 = vmatprep.mubr.bf16.mxu0 0
        %844 = vmatmul.mubr.bf16.gmra.mrb[0].mxu0 %v334
        %v845 = vpop.f32.mrb[0].mxu0
        %v846 = vadd.f32 %v382, %v845
        %v847 = vpop.f32.mrb[0].mxu0
        %v848 = vpop.f32.mrb[0].mxu0
        %v849 = vadd.f32 %v382, %v848
        %v850 = vpop.f32.mrb[0].mxu0
        %851 = vmatprep.mubr.bf16.mxu0 0
        %852 = vmatmul.mubr.bf16.gmra.mrb[0].mxu0 %v335
        %v853 = vpop.f32.mrb[0].mxu0
        %v854 = vadd.f32 %v382, %v853
        %v855 = vpop.f32.mrb[0].mxu0
        %v856 = vpop.f32.mrb[0].mxu0
        %v857 = vadd.f32 %v382, %v856
        %v858 = vpop.f32.mrb[0].mxu0
        %859 = vmatprep.mubr.bf16.mxu0 0
        %860 = vmatmul.mubr.bf16.gmra.mrb[0].mxu0 %v336
        %v861 = vpop.f32.mrb[0].mxu0
        %v862 = vadd.f32 %v382, %v861
        %v863 = vpop.f32.mrb[0].mxu0
        %v864 = vpop.f32.mrb[0].mxu0
        %v865 = vadd.f32 %v382, %v864
        %v866 = vpop.f32.mrb[0].mxu0
        %867 = vdwg.mxu0
        %v868 = vpack.c.bf16 %v553, %v549
        %v869 = vpack.c.bf16 %v555, %v551
        %v870 = vpack.c.bf16 %v745, %v742
        %v871 = vpack.c.bf16 %v563, %v559
        %v872 = vpack.c.bf16 %v565, %v561
        %v873 = vpack.c.bf16 %v753, %v750
        %v874 = vpack.c.bf16 %v573, %v569
        %v875 = vpack.c.bf16 %v575, %v571
        %v876 = vpack.c.bf16 %v761, %v758
        %v877 = vpack.c.bf16 %v583, %v579
        %v878 = vpack.c.bf16 %v585, %v581
        %v879 = vpack.c.bf16 %v769, %v766
        %v880 = vpack.c.bf16 %v593, %v589
        %v881 = vpack.c.bf16 %v595, %v591
        %v882 = vpack.c.bf16 %v777, %v774
        %v883 = vpack.c.bf16 %v603, %v599
        %v884 = vpack.c.bf16 %v605, %v601
        %v885 = vpack.c.bf16 %v785, %v782
        %v886 = vpack.c.bf16 %v613, %v609
        %v887 = vpack.c.bf16 %v615, %v611
        %v888 = vpack.c.bf16 %v793, %v790
        %v889 = vpack.c.bf16 %v623, %v619
        %v890 = vpack.c.bf16 %v625, %v621
        %v891 = vpack.c.bf16 %v801, %v798
        %v892 = vpack.c.bf16 %v633, %v629
        %v893 = vpack.c.bf16 %v635, %v631
        %v894 = vpack.c.bf16 %v809, %v806
        %v895 = vpack.c.bf16 %v643, %v639
        %v896 = vpack.c.bf16 %v645, %v641
        %v897 = vpack.c.bf16 %v817, %v814
        %v898 = vpack.c.bf16 %v653, %v649
        %v899 = vpack.c.bf16 %v655, %v651
        %v900 = vpack.c.bf16 %v825, %v822
        %v901 = vpack.c.bf16 %v663, %v659
        %v902 = vpack.c.bf16 %v665, %v661
        %v903 = vpack.c.bf16 %v833, %v830
        %v904 = vpack.c.bf16 %v673, %v669
        %v905 = vpack.c.bf16 %v675, %v671
        %v906 = vpack.c.bf16 %v841, %v838
        %v907 = vpack.c.bf16 %v683, %v679
        %v908 = vpack.c.bf16 %v685, %v681
        %v909 = vpack.c.bf16 %v849, %v846
        %v910 = vpack.c.bf16 %v693, %v689
        %v911 = vpack.c.bf16 %v695, %v691
        %v912 = vpack.c.bf16 %v857, %v854
        %v913 = vpack.c.bf16 %v703, %v699
        %v914 = vpack.c.bf16 %v705, %v701
        %v915 = vpack.c.bf16 %v865, %v862
        %v964 = vunpack.c.l.b16 %v868
        %v965 = vunpack.c.l.b16 %v869
        %v966 = vunpack.c.l.b16 %v870
        %v967 = vunpack.c.h.b16 %v868
        %v968 = vunpack.c.h.b16 %v869
        %v969 = vunpack.c.h.b16 %v870
        %v970 = vunpack.c.l.b16 %v871
        %v971 = vunpack.c.l.b16 %v872
        %v972 = vunpack.c.l.b16 %v873
        %v973 = vunpack.c.h.b16 %v871
        %v974 = vunpack.c.h.b16 %v872
        %v975 = vunpack.c.h.b16 %v873
        %v976 = vunpack.c.l.b16 %v874
        %v977 = vunpack.c.l.b16 %v875
        %v978 = vunpack.c.l.b16 %v876
        %v979 = vunpack.c.h.b16 %v874
        %v980 = vunpack.c.h.b16 %v875
        %v981 = vunpack.c.h.b16 %v876
        %v982 = vunpack.c.l.b16 %v877
        %v983 = vunpack.c.l.b16 %v878
        %v984 = vunpack.c.l.b16 %v879
        %v985 = vunpack.c.h.b16 %v877
        %v986 = vunpack.c.h.b16 %v878
        %v987 = vunpack.c.h.b16 %v879
        %v988 = vunpack.c.l.b16 %v880
        %v989 = vunpack.c.l.b16 %v881
        %v990 = vunpack.c.l.b16 %v882
        %v991 = vunpack.c.h.b16 %v880
        %v992 = vunpack.c.h.b16 %v881
        %v993 = vunpack.c.h.b16 %v882
        %v994 = vunpack.c.l.b16 %v883
        %v995 = vunpack.c.l.b16 %v884
        %v996 = vunpack.c.l.b16 %v885
        %v997 = vunpack.c.h.b16 %v883
        %v998 = vunpack.c.h.b16 %v884
        %v999 = vunpack.c.h.b16 %v885
        %v1000 = vunpack.c.l.b16 %v886
        %v1001 = vunpack.c.l.b16 %v887
        %v1002 = vunpack.c.l.b16 %v888
        %v1003 = vunpack.c.h.b16 %v886
        %v1004 = vunpack.c.h.b16 %v887
        %v1005 = vunpack.c.h.b16 %v888
        %v1006 = vunpack.c.l.b16 %v889
        %v1007 = vunpack.c.l.b16 %v890
        %v1008 = vunpack.c.l.b16 %v891
        %v1009 = vunpack.c.h.b16 %v889
        %v1010 = vunpack.c.h.b16 %v890
        %v1011 = vunpack.c.h.b16 %v891
        %v1012 = vunpack.c.l.b16 %v892
        %v1013 = vunpack.c.l.b16 %v893
        %v1014 = vunpack.c.l.b16 %v894
        %v1015 = vunpack.c.h.b16 %v892
        %v1016 = vunpack.c.h.b16 %v893
        %v1017 = vunpack.c.h.b16 %v894
        %v1018 = vunpack.c.l.b16 %v895
        %v1019 = vunpack.c.l.b16 %v896
        %v1020 = vunpack.c.l.b16 %v897
        %v1021 = vunpack.c.h.b16 %v895
        %v1022 = vunpack.c.h.b16 %v896
        %v1023 = vunpack.c.h.b16 %v897
        %v1024 = vunpack.c.l.b16 %v898
        %v1025 = vunpack.c.l.b16 %v899
        %v1026 = vunpack.c.l.b16 %v900
        %v1027 = vunpack.c.h.b16 %v898
        %v1028 = vunpack.c.h.b16 %v899
        %v1029 = vunpack.c.h.b16 %v900
        %v1030 = vunpack.c.l.b16 %v901
        %v1031 = vunpack.c.l.b16 %v902
        %v1032 = vunpack.c.l.b16 %v903
        %v1033 = vunpack.c.h.b16 %v901
        %v1034 = vunpack.c.h.b16 %v902
        %v1035 = vunpack.c.h.b16 %v903
        %v1036 = vunpack.c.l.b16 %v904
        %v1037 = vunpack.c.l.b16 %v905
        %v1038 = vunpack.c.l.b16 %v906
        %v1039 = vunpack.c.h.b16 %v904
        %v1040 = vunpack.c.h.b16 %v905
        %v1041 = vunpack.c.h.b16 %v906
        %v1042 = vunpack.c.l.b16 %v907
        %v1043 = vunpack.c.l.b16 %v908
        %v1044 = vunpack.c.l.b16 %v909
        %v1045 = vunpack.c.h.b16 %v907
        %v1046 = vunpack.c.h.b16 %v908
        %v1047 = vunpack.c.h.b16 %v909
        %v1048 = vunpack.c.l.b16 %v910
        %v1049 = vunpack.c.l.b16 %v911
        %v1050 = vunpack.c.l.b16 %v912
        %v1051 = vunpack.c.h.b16 %v910
        %v1052 = vunpack.c.h.b16 %v911
        %v1053 = vunpack.c.h.b16 %v912
        %v1054 = vunpack.c.l.b16 %v913
        %v1055 = vunpack.c.l.b16 %v914
        %v1056 = vunpack.c.l.b16 %v915
        %v1057 = vunpack.c.h.b16 %v913
        %v1058 = vunpack.c.h.b16 %v914
        %v1059 = vunpack.c.h.b16 %v915
        %v1060 = vpack.c.b16 %v965, %v964
        %v1061 = vpack.c.b16 %v966, %v966
        %v1062 = vpack.c.b16 %v968, %v967
        %v1063 = vpack.c.b16 %v969, %v969
        %v1064 = vpack.c.b16 %v971, %v970
        %v1065 = vpack.c.b16 %v972, %v972
        %v1066 = vpack.c.b16 %v974, %v973
        %v1067 = vpack.c.b16 %v975, %v975
        %v1068 = vpack.c.b16 %v977, %v976
        %v1069 = vpack.c.b16 %v978, %v978
        %v1070 = vpack.c.b16 %v980, %v979
        %v1071 = vpack.c.b16 %v981, %v981
        %v1072 = vpack.c.b16 %v983, %v982
        %v1073 = vpack.c.b16 %v984, %v984
        %v1074 = vpack.c.b16 %v986, %v985
        %v1075 = vpack.c.b16 %v987, %v987
        %v1076 = vpack.c.b16 %v989, %v988
        %v1077 = vpack.c.b16 %v990, %v990
        %v1078 = vpack.c.b16 %v992, %v991
        %v1079 = vpack.c.b16 %v993, %v993
        %v1080 = vpack.c.b16 %v995, %v994
        %v1081 = vpack.c.b16 %v996, %v996
        %v1082 = vpack.c.b16 %v998, %v997
        %v1083 = vpack.c.b16 %v999, %v999
        %v1084 = vpack.c.b16 %v1001, %v1000
        %v1085 = vpack.c.b16 %v1002, %v1002
        %v1086 = vpack.c.b16 %v1004, %v1003
        %v1087 = vpack.c.b16 %v1005, %v1005
        %v1088 = vpack.c.b16 %v1007, %v1006
        %v1089 = vpack.c.b16 %v1008, %v1008
        %v1090 = vpack.c.b16 %v1010, %v1009
        %v1091 = vpack.c.b16 %v1011, %v1011
        %v1092 = vpack.c.b16 %v1013, %v1012
        %v1093 = vpack.c.b16 %v1014, %v1014
        %v1094 = vpack.c.b16 %v1016, %v1015
        %v1095 = vpack.c.b16 %v1017, %v1017
        %v1096 = vpack.c.b16 %v1019, %v1018
        %v1097 = vpack.c.b16 %v1020, %v1020
        %v1098 = vpack.c.b16 %v1022, %v1021
        %v1099 = vpack.c.b16 %v1023, %v1023
        %v1100 = vpack.c.b16 %v1025, %v1024
        %v1101 = vpack.c.b16 %v1026, %v1026
        %v1102 = vpack.c.b16 %v1028, %v1027
        %v1103 = vpack.c.b16 %v1029, %v1029
        %v1104 = vpack.c.b16 %v1031, %v1030
        %v1105 = vpack.c.b16 %v1032, %v1032
        %v1106 = vpack.c.b16 %v1034, %v1033
        %v1107 = vpack.c.b16 %v1035, %v1035
        %v1108 = vpack.c.b16 %v1037, %v1036
        %v1109 = vpack.c.b16 %v1038, %v1038
        %v1110 = vpack.c.b16 %v1040, %v1039
        %v1111 = vpack.c.b16 %v1041, %v1041
        %v1112 = vpack.c.b16 %v1043, %v1042
        %v1113 = vpack.c.b16 %v1044, %v1044
        %v1114 = vpack.c.b16 %v1046, %v1045
        %v1115 = vpack.c.b16 %v1047, %v1047
        %v1116 = vpack.c.b16 %v1049, %v1048
        %v1117 = vpack.c.b16 %v1050, %v1050
        %v1118 = vpack.c.b16 %v1052, %v1051
        %v1119 = vpack.c.b16 %v1053, %v1053
        %v1120 = vpack.c.b16 %v1055, %v1054
        %v1121 = vpack.c.b16 %v1056, %v1056
        %v1122 = vpack.c.b16 %v1058, %v1057
        %v1123 = vpack.c.b16 %v1059, %v1059
        %1188 = vst [vmem:[%s221] sm:$0xff] %v1060
        %1189 = vst [vmem:[%s221 + $0x8] sm:$0xf] %v1061
        %1190 = vst [vmem:[%s221 + $0xc] sm:$0xff] %v1062
        %1191 = vst [vmem:[%s221 + $0x14] sm:$0xf] %v1063
        %1192 = vst [vmem:[%s221 + $0x18] sm:$0xff] %v1064
        %1193 = vst [vmem:[%s221 + $0x20] sm:$0xf] %v1065
        %1194 = vst [vmem:[%s221 + $0x24] sm:$0xff] %v1066
        %1195 = vst [vmem:[%s221 + $0x2c] sm:$0xf] %v1067
        %1196 = vst [vmem:[%s221 + $0x30] sm:$0xff] %v1068
        %1197 = vst [vmem:[%s221 + $0x38] sm:$0xf] %v1069
        %1198 = vst [vmem:[%s221 + $0x3c] sm:$0xff] %v1070
        %1199 = vst [vmem:[%s221 + $0x44] sm:$0xf] %v1071
        %1200 = vst [vmem:[%s221 + $0x48] sm:$0xff] %v1072
        %1201 = vst [vmem:[%s221 + $0x50] sm:$0xf] %v1073
        %1202 = vst [vmem:[%s221 + $0x54] sm:$0xff] %v1074
        %1203 = vst [vmem:[%s221 + $0x5c] sm:$0xf] %v1075
        %1204 = vst [vmem:[%s221 + $0x60] sm:$0xff] %v1076
        %1205 = vst [vmem:[%s221 + $0x68] sm:$0xf] %v1077
        %1206 = vst [vmem:[%s221 + $0x6c] sm:$0xff] %v1078
        %1207 = vst [vmem:[%s221 + $0x74] sm:$0xf] %v1079
        %1208 = vst [vmem:[%s221 + $0x78] sm:$0xff] %v1080
        %1209 = vst [vmem:[%s221 + $0x80] sm:$0xf] %v1081
        %1210 = vst [vmem:[%s221 + $0x84] sm:$0xff] %v1082
        %1211 = vst [vmem:[%s221 + $0x8c] sm:$0xf] %v1083
        %1212 = vst [vmem:[%s221 + $0x90] sm:$0xff] %v1084
        %1213 = vst [vmem:[%s221 + $0x98] sm:$0xf] %v1085
        %1214 = vst [vmem:[%s221 + $0x9c] sm:$0xff] %v1086
        %1215 = vst [vmem:[%s221 + $0xa4] sm:$0xf] %v1087
        %1216 = vst [vmem:[%s221 + $0xa8] sm:$0xff] %v1088
        %1217 = vst [vmem:[%s221 + $0xb0] sm:$0xf] %v1089
        %1218 = vst [vmem:[%s221 + $0xb4] sm:$0xff] %v1090
        %1219 = vst [vmem:[%s221 + $0xbc] sm:$0xf] %v1091
        %1220 = vst [vmem:[%s221 + $0xc0] sm:$0xff] %v1092
        %1221 = vst [vmem:[%s221 + $0xc8] sm:$0xf] %v1093
        %1222 = vst [vmem:[%s221 + $0xcc] sm:$0xff] %v1094
        %1223 = vst [vmem:[%s221 + $0xd4] sm:$0xf] %v1095
        %1224 = vst [vmem:[%s221 + $0xd8] sm:$0xff] %v1096
        %1225 = vst [vmem:[%s221 + $0xe0] sm:$0xf] %v1097
        %1226 = vst [vmem:[%s221 + $0xe4] sm:$0xff] %v1098
        %1227 = vst [vmem:[%s221 + $0xec] sm:$0xf] %v1099
        %1228 = vst [vmem:[%s221 + $0xf0] sm:$0xff] %v1100
        %1229 = vst [vmem:[%s221 + $0xf8] sm:$0xf] %v1101
        %1230 = vst [vmem:[%s221 + $0xfc] sm:$0xff] %v1102
        %1231 = vst [vmem:[%s221 + $0x104] sm:$0xf] %v1103
        %1232 = vst [vmem:[%s221 + $0x108] sm:$0xff] %v1104
        %1233 = vst [vmem:[%s221 + $0x110] sm:$0xf] %v1105
        %1234 = vst [vmem:[%s221 + $0x114] sm:$0xff] %v1106
        %1235 = vst [vmem:[%s221 + $0x11c] sm:$0xf] %v1107
        %1236 = vst [vmem:[%s221 + $0x120] sm:$0xff] %v1108
        %1237 = vst [vmem:[%s221 + $0x128] sm:$0xf] %v1109
        %1238 = vst [vmem:[%s221 + $0x12c] sm:$0xff] %v1110
        %1239 = vst [vmem:[%s221 + $0x134] sm:$0xf] %v1111
        %1240 = vst [vmem:[%s221 + $0x138] sm:$0xff] %v1112
        %1241 = vst [vmem:[%s221 + $0x140] sm:$0xf] %v1113
        %1242 = vst [vmem:[%s221 + $0x144] sm:$0xff] %v1114
        %1243 = vst [vmem:[%s221 + $0x14c] sm:$0xf] %v1115
        %1244 = vst [vmem:[%s221 + $0x150] sm:$0xff] %v1116
        %1245 = vst [vmem:[%s221 + $0x158] sm:$0xf] %v1117
        %1246 = vst [vmem:[%s221 + $0x15c] sm:$0xff] %v1118
        %1247 = vst [vmem:[%s221 + $0x164] sm:$0xf] %v1119
        %1248 = vst [vmem:[%s221 + $0x168] sm:$0xff] %v1120
        %1249 = vst [vmem:[%s221 + $0x170] sm:$0xf] %v1121
        %1250 = vst [vmem:[%s221 + $0x174] sm:$0xff] %v1122
        %1251 = vst [vmem:[%s221 + $0x17c] sm:$0xf] %v1123
        %s1252 = sand.u32 %s113, 1
        %s1253 = scalar_lea.sflag [#allocation4], %s1252
        %s1254 = sand.u32 %s113, 1
        %s1255 = smul.addr %s1254, 384
        %s1256 = scalar_lea.vmem [#allocation7], %s1255
        // Predicated region
        $region41: #{tpu_custom_call.1} parent=31 // pred_check
          %p1257 = pneg %p123
        $region42: #{tpu_custom_call.1} parent=31 // pred_check_branch
          %1259 = sbr.rel (%p1257) target = $region44
        $region43: #{tpu_custom_call.1} parent=31 // pred_region
          %s1260 = smul.u32 32, %s26
          %s1262 = ssub.s32 6144, 6144
          %1263 = vsyncadd %s1253, %s1262
          %s1264 = smul.addr %s1260, 3
          %s1265 = smul.addr %s25, 96
          %s1266 = sadd.s32 %s1264, %s1265
          %s1267 = smul.addr %s1266, 64
          %s1268 = scalar_lea.hbm %s3, %s1267
          %s1269 = sshll.u32 %s1256, 4
          %s1270 = int_to_ptr.vmem [resolvable:$true] %s1269
          %1275 = dma.vmem_to_hbm [thread:$0]  %s1270, 6144, %s1268, %s1253, 192, 192, 12
        $region44: #{tpu_custom_call.1} parent=31 // pred_fallthru
          _
      $region32: #{tpu_custom_call.1} parent=5 // pred_fallthru
        _
      %p1276 = scmp.le.s32.totalorder 2, %s16
      // Predicated region
      $region45: #{tpu_custom_call.1} parent=5 // pred_check
        %p1277 = pneg %p1276
      $region46: #{tpu_custom_call.1} parent=5 // pred_check_branch
        %1279 = sbr.rel (%p1277) target = $region48
      $region47: #{tpu_custom_call.1} parent=5 // pred_region
        %s1280 = ssub.s32 %s16, 2
        // Predicated region
        $region49: #{tpu_custom_call.1} parent=47 // pred_check
          %p1281 = pneg %p129
        $region50: #{tpu_custom_call.1} parent=47 // pred_check_branch
          %1283 = sbr.rel (%p1281) target = $region52
        $region51: #{tpu_custom_call.1} parent=47 // pred_region
          %s1284 = sand.u32 %s114, 1
          %s1285 = scalar_lea.sflag [#allocation4], %s1284
          %s1286 = sand.u32 %s114, 1
          %s1287 = smul.addr %s1286, 384
          %s1288 = scalar_lea.vmem [#allocation7], %s1287
          %1289 = dma.done %s1285, 6144
        $region52: #{tpu_custom_call.1} parent=47 // pred_fallthru
          _
      $region48: #{tpu_custom_call.1} parent=5 // pred_fallthru
        _
    $region6: #{tpu_custom_call.1} parent=1 // loop_footer
      %s20 = sadd.s32 1, %s16
    $region7: #{tpu_custom_call.1} parent=1 // loop_footer_branch
      %15 = sbr.rel target = $region3
    $region8: #{tpu_custom_call.1} parent=1 // loop_exit
      _
    %1290 = vsyncpa [#allocation3], 1
    %s1291 = scalar_lea.sflag [#allocation3], 1
    %1292 = vsyncpa %s1291, 1
    %1293 = vsyncpa [#allocation6], 1
    %1294 = vsyncpa [#allocation4], 1
    %s1295 = scalar_lea.sflag [#allocation4], 1
    %1296 = vsyncpa %s1295, 1

</llo_original>
